<compile_context>
chip_gen: v5e
topology: v5e:2x2
jax: 0.10.0
libtpu: 0.0.40
codegen_flags: <defaults>
</compile_context>

<pallas_src>
import jax
import jax.numpy as jnp
from jax.experimental import pallas as pl
from jax.experimental.pallas import tpu as pltpu


def _round_up(n, m):
    return ((n + m - 1) // m) * m


# ---------------------------------------------------------------------------
# Kernels
# ---------------------------------------------------------------------------
def _mcdropout_train_kernel(x_ref, w1_ref, b1_ref, w2_ref, b2_ref, mask_ref, o_ref):
    # fc1 + ReLU  (MXU + VPU)
    h = jnp.dot(x_ref[...], w1_ref[...], preferred_element_type=jnp.float32)
    h = jnp.maximum(h + b1_ref[...], 0.0)
    # Dropout: mask is pre-scaled (0 or 1/keep_prob) -> one VPU multiply.
    h = h * mask_ref[...]
    # fc2 + sigmoid (MXU + EUP)
    z = jnp.dot(h, w2_ref[...], preferred_element_type=jnp.float32) + b2_ref[...]
    o_ref[...] = jax.nn.sigmoid(z)


def _mcdropout_eval_kernel(x_ref, w1_ref, b1_ref, w2_ref, b2_ref, o_ref):
    h = jnp.dot(x_ref[...], w1_ref[...], preferred_element_type=jnp.float32)
    h = jnp.maximum(h + b1_ref[...], 0.0)
    z = jnp.dot(h, w2_ref[...], preferred_element_type=jnp.float32) + b2_ref[...]
    o_ref[...] = jax.nn.sigmoid(z)


# ---------------------------------------------------------------------------
# Wrapper
# ---------------------------------------------------------------------------
def mc_dropout_nn(x, w1, b1, w2, b2, *, p=0.5, training=True, rng_key=None,
                  block_b=512):
    """Forward pass of MCDropoutNN.

    x:  [B, D_in] float32
    w1: [D_in, H], b1: [H]        (W already stored as [in, out], i.e. W.T of torch)
    w2: [H, O],    b2: [O]
    training: dropout active (MC-dropout / torch train mode) when True.
    """
    B, D = x.shape
    H = w1.shape[1]
    O = w2.shape[1]

    # Lane-pad all feature dims to multiples of 128 (lane-dense loads/stores,
    # aligned MXU feeds on every generation). Zero padding is exact for this net.
    D_pad = _round_up(D, 128)
    H_pad = _round_up(H, 128)
    O_pad = _round_up(O, 128)

    # Batch tile: big enough to amortize the ~0.35 us per-grid-step overhead,
    # small enough that (x + mask + out tiles, double-buffered) + resident
    # weights stay far under the 32 MiB scoped-VMEM default (v7x budget).
    TB = min(block_b, _round_up(B, 8))
    B_pad = _round_up(B, TB)

    x_p = jnp.pad(x, ((0, B_pad - B), (0, D_pad - D)))
    w1_p = jnp.pad(w1, ((0, D_pad - D), (0, H_pad - H)))
    b1_p = jnp.pad(b1, (0, H_pad - H)).reshape(1, H_pad)
    w2_p = jnp.pad(w2, ((0, H_pad - H), (0, O_pad - O)))
    b2_p = jnp.pad(b2, (0, O_pad - O)).reshape(1, O_pad)

    grid = (pl.cdiv(B_pad, TB),)
    x_spec = pl.BlockSpec((TB, D_pad), lambda i: (i, 0))
    w1_spec = pl.BlockSpec((D_pad, H_pad), lambda i: (0, 0))   # VMEM-resident
    b1_spec = pl.BlockSpec((1, H_pad), lambda i: (0, 0))
    w2_spec = pl.BlockSpec((H_pad, O_pad), lambda i: (0, 0))   # VMEM-resident
    b2_spec = pl.BlockSpec((1, O_pad), lambda i: (0, 0))
    out_spec = pl.BlockSpec((TB, O_pad), lambda i: (i, 0))
    out_shape = jax.ShapeDtypeStruct((B_pad, O_pad), jnp.float32)
    cparams = pltpu.CompilerParams(dimension_semantics=("parallel",))

    use_dropout = bool(training) and float(p) > 0.0
    if use_dropout:
        if rng_key is None:
            rng_key = jax.random.PRNGKey(0)
        keep_prob = 1.0 - float(p)
        # Pre-scaled inverted dropout mask, distinct per batch row (and thus per
        # tile) -- generated host-side so no in-kernel PRNG lowering is needed.
        keep = jax.random.bernoulli(rng_key, keep_prob, (B_pad, H_pad))
        mask = keep.astype(jnp.float32) * (1.0 / keep_prob)
        mask_spec = pl.BlockSpec((TB, H_pad), lambda i: (i, 0))
        out = pl.pallas_call(
            _mcdropout_train_kernel,
            out_shape=out_shape,
            grid=grid,
            in_specs=[x_spec, w1_spec, b1_spec, w2_spec, b2_spec, mask_spec],
            out_specs=out_spec,
            compiler_params=cparams,
        )(x_p, w1_p, b1_p, w2_p, b2_p, mask)
    else:
        out = pl.pallas_call(
            _mcdropout_eval_kernel,
            out_shape=out_shape,
            grid=grid,
            in_specs=[x_spec, w1_spec, b1_spec, w2_spec, b2_spec],
            out_specs=out_spec,
            compiler_params=cparams,
        )(x_p, w1_p, b1_p, w2_p, b2_p)

    return out[:B, :O]


def mc_dropout_predict(x, w1, b1, w2, b2, *, p=0.5, num_samples=8, rng_key=None,
                       block_b=512):
    """MC-dropout inference: fold T stochastic samples into the batch dimension
    and run ONE pipelined kernel call instead of T tiny launches.
    Returns [num_samples, B, O]."""
    if rng_key is None:
        rng_key = jax.random.PRNGKey(0)
    B = x.shape[0]
    x_rep = jnp.tile(x, (num_samples, 1))                      # (T*B, D)
    out = mc_dropout_nn(x_rep, w1, b1, w2, b2, p=p, training=True,
                        rng_key=rng_key, block_b=block_b)
    return out.reshape(num_samples, B, -1)


# ---------------------------------------------------------------------------
# Demo / checks
# ---------------------------------------------------------------------------
if __name__ == "__main__":
    # Small shapes implied by the module: Linear(input_dim, hidden_dim) etc.
    B, D_IN, HID, D_OUT = 2, 16, 32, 8
    P = 0.5

    key = jax.random.PRNGKey(0)
    kx, k1, kb1, k2, kb2 = jax.random.split(key, 5)

    x = jax.random.normal(kx, (B, D_IN), dtype=jnp.float32)
    bound1 = 1.0 / (D_IN ** 0.5)
    w1 = jax.random.uniform(k1, (D_IN, HID), minval=-bound1, maxval=bound1,
                            dtype=jnp.float32)
    b1 = jax.random.uniform(kb1, (HID,), minval=-bound1, maxval=bound1,
                            dtype=jnp.float32)
    bound2 = 1.0 / (HID ** 0.5)
    w2 = jax.random.uniform(k2, (HID, D_OUT), minval=-bound2, maxval=bound2,
                            dtype=jnp.float32)
    b2 = jax.random.uniform(kb2, (D_OUT,), minval=-bound2, maxval=bound2,
                            dtype=jnp.float32)

    # ---- training (dropout active) path, checked against a plain-JAX reference
    #      that uses the identical (regenerated) dropout mask.
    drop_key = jax.random.PRNGKey(7)
    out_train = jax.block_until_ready(
        mc_dropout_nn(x, w1, b1, w2, b2, p=P, training=True, rng_key=drop_key))
    assert out_train.shape == (B, D_OUT)
    assert bool(jnp.all((out_train >= 0.0) & (out_train <= 1.0)))

    TB = min(512, _round_up(B, 8))
    B_pad = _round_up(B, TB)
    H_pad = _round_up(HID, 128)
    keep_ref = jax.random.bernoulli(drop_key, 1.0 - P, (B_pad, H_pad))[:B, :HID]
    mask_ref = keep_ref.astype(jnp.float32) / (1.0 - P)
    h_ref = jnp.maximum(x @ w1 + b1, 0.0) * mask_ref
    ref_train = jax.nn.sigmoid(h_ref @ w2 + b2)
    assert bool(jnp.allclose(out_train, ref_train, atol=1e-5, rtol=1e-5))

    # ---- eval (no dropout) path vs. plain-JAX reference.
    out_eval = jax.block_until_ready(
        mc_dropout_nn(x, w1, b1, w2, b2, p=P, training=False))
    ref_eval = jax.nn.sigmoid(jnp.maximum(x @ w1 + b1, 0.0) @ w2 + b2)
    assert bool(jnp.allclose(out_eval, ref_eval, atol=1e-5, rtol=1e-5))

    # ---- MC inference: T samples folded into one kernel call.
    mc_out = jax.block_until_ready(
        mc_dropout_predict(x, w1, b1, w2, b2, p=P, num_samples=4,
                           rng_key=jax.random.PRNGKey(42)))
    assert mc_out.shape == (4, B, D_OUT)
    assert bool(jnp.all((mc_out >= 0.0) & (mc_out <= 1.0)))

    print("KERNEL_OK")
</pallas_src>

<mosaic_0001>
module attributes {stable_mosaic.version = 11 : i64} {
  func.func @_mcdropout_train_kernel(%arg0: i32, %arg1: memref<8x128xf32, #tpu.memory_space<vmem>>, %arg2: memref<128x128xf32, #tpu.memory_space<vmem>>, %arg3: memref<1x128xf32, #tpu.memory_space<vmem>>, %arg4: memref<128x128xf32, #tpu.memory_space<vmem>>, %arg5: memref<1x128xf32, #tpu.memory_space<vmem>>, %arg6: memref<8x128xf32, #tpu.memory_space<vmem>>, %arg7: memref<8x128xf32, #tpu.memory_space<vmem>>) attributes {dimension_semantics = [#tpu.dimension_semantics<parallel>], iteration_bounds = array<i64: 1>, scalar_prefetch = 0 : i64, scratch_operands = 0 : i64, tpu.core_type = #tpu.core_type<tc>, window_params = [{transform_indices = @transform_0, window_bounds = array<i64: 8, 128>}, {pipeline_mode = #tpu.pipeline_mode<synchronous>, transform_indices = @transform_1, window_bounds = array<i64: 128, 128>}, {pipeline_mode = #tpu.pipeline_mode<synchronous>, transform_indices = @transform_2, window_bounds = array<i64: 1, 128>}, {pipeline_mode = #tpu.pipeline_mode<synchronous>, transform_indices = @transform_3, window_bounds = array<i64: 128, 128>}, {pipeline_mode = #tpu.pipeline_mode<synchronous>, transform_indices = @transform_4, window_bounds = array<i64: 1, 128>}, {transform_indices = @transform_5, window_bounds = array<i64: 8, 128>}, {transform_indices = @transform_6, window_bounds = array<i64: 8, 128>}]} {
    %c0 = arith.constant 0 : index
    %c0_0 = arith.constant 0 : index
    %0 = vector.load %arg1[%c0, %c0_0] : memref<8x128xf32, #tpu.memory_space<vmem>>, vector<8x128xf32>
    %c0_1 = arith.constant 0 : index
    %c0_2 = arith.constant 0 : index
    %1 = vector.load %arg2[%c0_1, %c0_2] : memref<128x128xf32, #tpu.memory_space<vmem>>, vector<128x128xf32>
    %cst = arith.constant dense<0.000000e+00> : vector<8x128xf32>
    %2 = tpu.matmul %0, %1, %cst {dimension_numbers = #tpu.dot_dimension_numbers<[1], [0], [0], [1], [0, 0, 1, 1], [], []>} : vector<8x128xf32>, vector<128x128xf32>, vector<8x128xf32> -> vector<8x128xf32>
    %c0_3 = arith.constant 0 : index
    %c0_4 = arith.constant 0 : index
    %3 = vector.load %arg3[%c0_3, %c0_4] : memref<1x128xf32, #tpu.memory_space<vmem>>, vector<1x128xf32>
    %4 = vector.broadcast %3 : vector<1x128xf32> to vector<8x128xf32>
    %5 = arith.addf %2, %4 : vector<8x128xf32>
    %cst_5 = arith.constant 0.000000e+00 : f32
    %6 = vector.broadcast %cst_5 : f32 to vector<8x128xf32>
    %7 = arith.maximumf %5, %6 : vector<8x128xf32>
    %c0_6 = arith.constant 0 : index
    %c0_7 = arith.constant 0 : index
    %8 = vector.load %arg6[%c0_6, %c0_7] : memref<8x128xf32, #tpu.memory_space<vmem>>, vector<8x128xf32>
    %9 = arith.mulf %7, %8 : vector<8x128xf32>
    %c0_8 = arith.constant 0 : index
    %c0_9 = arith.constant 0 : index
    %10 = vector.load %arg4[%c0_8, %c0_9] : memref<128x128xf32, #tpu.memory_space<vmem>>, vector<128x128xf32>
    %cst_10 = arith.constant dense<0.000000e+00> : vector<8x128xf32>
    %11 = tpu.matmul %9, %10, %cst_10 {dimension_numbers = #tpu.dot_dimension_numbers<[1], [0], [0], [1], [0, 0, 1, 1], [], []>} : vector<8x128xf32>, vector<128x128xf32>, vector<8x128xf32> -> vector<8x128xf32>
    %c0_11 = arith.constant 0 : index
    %c0_12 = arith.constant 0 : index
    %12 = vector.load %arg5[%c0_11, %c0_12] : memref<1x128xf32, #tpu.memory_space<vmem>>, vector<1x128xf32>
    %13 = vector.broadcast %12 : vector<1x128xf32> to vector<8x128xf32>
    %14 = arith.addf %11, %13 : vector<8x128xf32>
    %15 = arith.negf %14 : vector<8x128xf32>
    %16 = math.exp %15 : vector<8x128xf32>
    %cst_13 = arith.constant 1.000000e+00 : f32
    %17 = vector.broadcast %cst_13 : f32 to vector<8x128xf32>
    %18 = arith.addf %17, %16 : vector<8x128xf32>
    %19 = arith.divf %17, %18 : vector<8x128xf32>
    %c0_14 = arith.constant 0 : index
    %c0_15 = arith.constant 0 : index
    %20 = vector.load %arg7[%c0_14, %c0_15] : memref<8x128xf32, #tpu.memory_space<vmem>>, vector<8x128xf32>
    tpu.vector_store %arg7[%c0_14, %c0_15], %19 {strides = array<i32>} : memref<8x128xf32, #tpu.memory_space<vmem>>, vector<8x128xf32>,
    return
  }
  func.func @transform_0(%arg0: i32) -> (i32, i32) {
    %c0_i32 = arith.constant 0 : i32
    %c0_i32_0 = arith.constant 0 : i32
    return %arg0, %c0_i32 : i32, i32
  }
  func.func @transform_1(%arg0: i32) -> (i32, i32) {
    %c0_i32 = arith.constant 0 : i32
    %c0_i32_0 = arith.constant 0 : i32
    %c0_i32_1 = arith.constant 0 : i32
    return %c0_i32, %c0_i32_0 : i32, i32
  }
  func.func @transform_2(%arg0: i32) -> (i32, i32) {
    %c0_i32 = arith.constant 0 : i32
    %c0_i32_0 = arith.constant 0 : i32
    %c0_i32_1 = arith.constant 0 : i32
    return %c0_i32, %c0_i32_0 : i32, i32
  }
  func.func @transform_3(%arg0: i32) -> (i32, i32) {
    %c0_i32 = arith.constant 0 : i32
    %c0_i32_0 = arith.constant 0 : i32
    %c0_i32_1 = arith.constant 0 : i32
    return %c0_i32, %c0_i32_0 : i32, i32
  }
  func.func @transform_4(%arg0: i32) -> (i32, i32) {
    %c0_i32 = arith.constant 0 : i32
    %c0_i32_0 = arith.constant 0 : i32
    %c0_i32_1 = arith.constant 0 : i32
    return %c0_i32, %c0_i32_0 : i32, i32
  }
  func.func @transform_5(%arg0: i32) -> (i32, i32) {
    %c0_i32 = arith.constant 0 : i32
    %c0_i32_0 = arith.constant 0 : i32
    return %arg0, %c0_i32 : i32, i32
  }
  func.func @transform_6(%arg0: i32) -> (i32, i32) {
    %c0_i32 = arith.constant 0 : i32
    %c0_i32_0 = arith.constant 0 : i32
    return %arg0, %c0_i32 : i32, i32
  }
}

</mosaic_0001>

<llo_original>
// kernel: tpu_custom_call.1
$region0: #{tpu_custom_call.1}
  #allocation0 [shape = 'u32[]', space=smem, size = 0x4, offset = 0x4, fixed_abs, tag = 'smem constant byte address 0x4 - core index']
  #allocation1 [shape = 'u32[72,128]{1,0:T(1,128)}', space=vmem, size = 0x9000, scoped, tag = 'internal scratch']
  %s0 = inlined_call_operand.hbm [shape: f32[8,128], index: 0, kind: input, shape index: {}]
  %s1 = inlined_call_operand.hbm [shape: f32[128,128], index: 1, kind: input, shape index: {}]
  %s2 = inlined_call_operand.vmem [shape: f32[1,128], index: 2, kind: input, shape index: {}]
  %s3 = inlined_call_operand.hbm [shape: f32[128,128], index: 3, kind: input, shape index: {}]
  %s4 = inlined_call_operand.vmem [shape: f32[1,128], index: 4, kind: input, shape index: {}]
  %s5 = inlined_call_operand.hbm [shape: f32[8,128], index: 5, kind: input, shape index: {}]
  %s6 = inlined_call_operand.hbm [shape: f32[8,128], index: 6, kind: output, shape index: {}]
  %s7 = sld [smem:[#allocation0]]
  $region50: #{tpu_custom_call.1} parent=0
    _
  %s9 = ssub.s32 1, %s7
  %s10 = scalar_select 0, %s9, %s7
  $region1: #{tpu_custom_call.1} parent=0
    #allocation2 [shape = 'u8[4096]{0}', space=vmem, size = 0x1000, scoped, tag = 'input window, operand 0, single buffered']
    #allocation3 [shape = 's32[1]{0}', space=sflag, size = 0x4, scoped, tag = 'scoped memory for tpu_custom_call.1']
    #allocation4 [shape = 's32[1]{0}', space=sflag, size = 0x4, scoped, tag = 'scoped memory for tpu_custom_call.1']
    #allocation5 [shape = 'u8[65536]{0}', space=vmem, size = 0x10000, scoped, tag = 'input window, operand 1, single buffered']
    #allocation6 [shape = 's32[1]{0}', space=sflag, size = 0x4, scoped, tag = 'scoped memory for tpu_custom_call.1']
    #allocation7 [shape = 'u8[65536]{0}', space=vmem, size = 0x10000, scoped, tag = 'input window, operand 3, single buffered']
    #allocation8 [shape = 'u8[4096]{0}', space=vmem, size = 0x1000, scoped, tag = 'input window, operand 5, single buffered']
    #allocation9 [shape = 's32[1]{0}', space=sflag, size = 0x4, scoped, tag = 'scoped memory for tpu_custom_call.1']
    #allocation10 [shape = 'u8[4096]{0}', space=vmem, size = 0x1000, scoped, tag = 'output window, operand 0, single buffered']
    %11 = vsyncpa [#allocation3], 0
    %12 = vsyncpa [#allocation6], 0
    %13 = vsyncpa [#allocation9], 0
    %14 = vsyncpa [#allocation4], 0
    // Predicated region
    $region2: #{tpu_custom_call.1} parent=1 // pred_check
      _
    $region3: #{tpu_custom_call.1} parent=1 // pred_check_branch
      %16 = sbr.rel (0) target = $region5
    $region4: #{tpu_custom_call.1} parent=1 // pred_region
      %18 = vsyncadd [#allocation3], 0
      %s20 = sshll.u32 %s0, 4
      %s21 = int_to_ptr.hbm [resolvable:$true] %s20
      %s22 = sshll.u32 [#allocation2], 4
      %s23 = int_to_ptr.vmem [resolvable:$true] %s22
      %25 = dma.hbm_to_vmem [thread:$0]  %s21, 128, %s23, [#allocation3]
    $region5: #{tpu_custom_call.1} parent=1 // pred_fallthru
      _
    // Predicated region
    $region6: #{tpu_custom_call.1} parent=1 // pred_check
      _
    $region7: #{tpu_custom_call.1} parent=1 // pred_check_branch
      %27 = sbr.rel (0) target = $region9
    $region8: #{tpu_custom_call.1} parent=1 // pred_region
      %29 = vsyncadd [#allocation6], 0
      %s30 = sshll.u32 %s1, 4
      %s31 = int_to_ptr.hbm [resolvable:$true] %s30
      %s32 = sshll.u32 [#allocation5], 4
      %s33 = int_to_ptr.vmem [resolvable:$true] %s32
      %38 = dma.hbm_to_vmem [thread:$0]  %s31, 2048, %s33, [#allocation6], 128, 128, 8
    $region9: #{tpu_custom_call.1} parent=1 // pred_fallthru
      _
    // Predicated region
    $region10: #{tpu_custom_call.1} parent=1 // pred_check
      _
    $region11: #{tpu_custom_call.1} parent=1 // pred_check_branch
      %40 = sbr.rel (0) target = $region13
    $region12: #{tpu_custom_call.1} parent=1 // pred_region
      _
    $region13: #{tpu_custom_call.1} parent=1 // pred_fallthru
      _
    // Predicated region
    $region14: #{tpu_custom_call.1} parent=1 // pred_check
      _
    $region15: #{tpu_custom_call.1} parent=1 // pred_check_branch
      %42 = sbr.rel (0) target = $region17
    $region16: #{tpu_custom_call.1} parent=1 // pred_region
      %44 = vsyncadd [#allocation6], 0
      %s45 = sshll.u32 %s3, 4
      %s46 = int_to_ptr.hbm [resolvable:$true] %s45
      %s47 = sshll.u32 [#allocation7], 4
      %s48 = int_to_ptr.vmem [resolvable:$true] %s47
      %53 = dma.hbm_to_vmem [thread:$0]  %s46, 2048, %s48, [#allocation6], 128, 128, 8
    $region17: #{tpu_custom_call.1} parent=1 // pred_fallthru
      _
    // Predicated region
    $region18: #{tpu_custom_call.1} parent=1 // pred_check
      _
    $region19: #{tpu_custom_call.1} parent=1 // pred_check_branch
      %55 = sbr.rel (0) target = $region21
    $region20: #{tpu_custom_call.1} parent=1 // pred_region
      _
    $region21: #{tpu_custom_call.1} parent=1 // pred_fallthru
      _
    // Predicated region
    $region22: #{tpu_custom_call.1} parent=1 // pred_check
      _
    $region23: #{tpu_custom_call.1} parent=1 // pred_check_branch
      %57 = sbr.rel (0) target = $region25
    $region24: #{tpu_custom_call.1} parent=1 // pred_region
      %59 = vsyncadd [#allocation9], 0
      %s61 = sshll.u32 %s5, 4
      %s62 = int_to_ptr.hbm [resolvable:$true] %s61
      %s63 = sshll.u32 [#allocation8], 4
      %s64 = int_to_ptr.vmem [resolvable:$true] %s63
      %66 = dma.hbm_to_vmem [thread:$0]  %s62, 128, %s64, [#allocation9]
    $region25: #{tpu_custom_call.1} parent=1 // pred_fallthru
      _
    // Predicated region
    $region26: #{tpu_custom_call.1} parent=1 // pred_check
      _
    $region27: #{tpu_custom_call.1} parent=1 // pred_check_branch
      %68 = sbr.rel (0) target = $region29
    $region28: #{tpu_custom_call.1} parent=1 // pred_region
      %70 = dma.done [#allocation3], 128
    $region29: #{tpu_custom_call.1} parent=1 // pred_fallthru
      _
    // Predicated region
    $region30: #{tpu_custom_call.1} parent=1 // pred_check
      _
    $region31: #{tpu_custom_call.1} parent=1 // pred_check_branch
      %72 = sbr.rel (0) target = $region33
    $region32: #{tpu_custom_call.1} parent=1 // pred_region
      %74 = dma.done [#allocation6], 2048
    $region33: #{tpu_custom_call.1} parent=1 // pred_fallthru
      _
    // Predicated region
    $region34: #{tpu_custom_call.1} parent=1 // pred_check
      _
    $region35: #{tpu_custom_call.1} parent=1 // pred_check_branch
      %76 = sbr.rel (0) target = $region37
    $region36: #{tpu_custom_call.1} parent=1 // pred_region
      %78 = dma.done [#allocation6], 2048
    $region37: #{tpu_custom_call.1} parent=1 // pred_fallthru
      _
    // Predicated region
    $region38: #{tpu_custom_call.1} parent=1 // pred_check
      _
    $region39: #{tpu_custom_call.1} parent=1 // pred_check_branch
      %80 = sbr.rel (0) target = $region41
    $region40: #{tpu_custom_call.1} parent=1 // pred_region
      %82 = dma.done [#allocation9], 128
    $region41: #{tpu_custom_call.1} parent=1 // pred_fallthru
      _
    %v83 = vld [vmem:[#allocation2] sm:$0xff]
    %v84 = vld [vmem:[#allocation5] sm:$0xff]
    %v85 = vld [vmem:[#allocation5 + $0x8] sm:$0xff]
    %v86 = vld [vmem:[#allocation5 + $0x10] sm:$0xff]
    %v87 = vld [vmem:[#allocation5 + $0x18] sm:$0xff]
    %v88 = vld [vmem:[#allocation5 + $0x20] sm:$0xff]
    %v89 = vld [vmem:[#allocation5 + $0x28] sm:$0xff]
    %v90 = vld [vmem:[#allocation5 + $0x30] sm:$0xff]
    %v91 = vld [vmem:[#allocation5 + $0x38] sm:$0xff]
    %v92 = vld [vmem:[#allocation5 + $0x40] sm:$0xff]
    %v93 = vld [vmem:[#allocation5 + $0x48] sm:$0xff]
    %v94 = vld [vmem:[#allocation5 + $0x50] sm:$0xff]
    %v95 = vld [vmem:[#allocation5 + $0x58] sm:$0xff]
    %v96 = vld [vmem:[#allocation5 + $0x60] sm:$0xff]
    %v97 = vld [vmem:[#allocation5 + $0x68] sm:$0xff]
    %v98 = vld [vmem:[#allocation5 + $0x70] sm:$0xff]
    %v99 = vld [vmem:[#allocation5 + $0x78] sm:$0xff]
    %v100 = vld [vmem:[%s2] sm:$0x1]
    %v102 = vperm.slane %v100, 0
    %104 = vmatpush.msra.mxu0 %v99
    %105 = vmatpush.msra.mxu0 %v98
    %106 = vmatpush.msra.mxu0 %v97
    %107 = vmatpush.msra.mxu0 %v96
    %108 = vmatpush.msra.mxu0 %v95
    %109 = vmatpush.msra.mxu0 %v94
    %110 = vmatpush.msra.mxu0 %v93
    %111 = vmatpush.msra.mxu0 %v92
    %112 = vmatpush.msra.mxu0 %v91
    %113 = vmatpush.msra.mxu0 %v90
    %114 = vmatpush.msra.mxu0 %v89
    %115 = vmatpush.msra.mxu0 %v88
    %116 = vmatpush.msra.mxu0 %v87
    %117 = vmatpush.msra.mxu0 %v86
    %118 = vmatpush.msra.mxu0 %v85
    %119 = vmatpush.msra.mxu0 %v84
    %120 = vmatmul.f32.gmra.mxu0 %v83
    %v121 = vpop.f32.mrf.mxu0
    %v122 = vadd.f32 %v102, %v121
    %123 = vdwg.mxu0
    %v124 = vmax.f32 %v122, 0.0
    %v125 = vld [vmem:[#allocation8] sm:$0xff]
    %v126 = vmul.f32 %v124, %v125
    %v127 = vld [vmem:[#allocation7] sm:$0xff]
    %v128 = vld [vmem:[#allocation7 + $0x8] sm:$0xff]
    %v129 = vld [vmem:[#allocation7 + $0x10] sm:$0xff]
    %v130 = vld [vmem:[#allocation7 + $0x18] sm:$0xff]
    %v131 = vld [vmem:[#allocation7 + $0x20] sm:$0xff]
    %v132 = vld [vmem:[#allocation7 + $0x28] sm:$0xff]
    %v133 = vld [vmem:[#allocation7 + $0x30] sm:$0xff]
    %v134 = vld [vmem:[#allocation7 + $0x38] sm:$0xff]
    %v135 = vld [vmem:[#allocation7 + $0x40] sm:$0xff]
    %v136 = vld [vmem:[#allocation7 + $0x48] sm:$0xff]
    %v137 = vld [vmem:[#allocation7 + $0x50] sm:$0xff]
    %v138 = vld [vmem:[#allocation7 + $0x58] sm:$0xff]
    %v139 = vld [vmem:[#allocation7 + $0x60] sm:$0xff]
    %v140 = vld [vmem:[#allocation7 + $0x68] sm:$0xff]
    %v141 = vld [vmem:[#allocation7 + $0x70] sm:$0xff]
    %v142 = vld [vmem:[#allocation7 + $0x78] sm:$0xff]
    %v143 = vld [vmem:[%s4] sm:$0x1]
    %v145 = vperm.slane %v143, 0
    %147 = vmatpush.msra.mxu0 %v142
    %148 = vmatpush.msra.mxu0 %v141
    %149 = vmatpush.msra.mxu0 %v140
    %150 = vmatpush.msra.mxu0 %v139
    %151 = vmatpush.msra.mxu0 %v138
    %152 = vmatpush.msra.mxu0 %v137
    %153 = vmatpush.msra.mxu0 %v136
    %154 = vmatpush.msra.mxu0 %v135
    %155 = vmatpush.msra.mxu0 %v134
    %156 = vmatpush.msra.mxu0 %v133
    %157 = vmatpush.msra.mxu0 %v132
    %158 = vmatpush.msra.mxu0 %v131
    %159 = vmatpush.msra.mxu0 %v130
    %160 = vmatpush.msra.mxu0 %v129
    %161 = vmatpush.msra.mxu0 %v128
    %162 = vmatpush.msra.mxu0 %v127
    %163 = vmatmul.f32.gmra.mxu0 %v126
    %v164 = vpop.f32.mrf.mxu0
    %v165 = vadd.f32 %v145, %v164
    %166 = vdwg.mxu0
    %v167 = vxor.u32 %v165, 2147483648
    %v168 = vmul.f32 %v167, 1.442695
    %v169 = vpow.pop %v168
    %v170 = vadd.f32 %v169, 1.0
    %v171 = vrcp.pop %v170
    %v172 = vmul.f32 %v170, %v171
    %v173 = vsub.f32 1.0, %v172
    %v174 = vmul.f32 %v171, %v173
    %v175 = vadd.f32 %v171, %v174
    %vm176 = vweird.f32 %v170
    %vm177 = vweird.f32 %v171
    %vm178 = vmor %vm176, %vm177
    %v179 = vsel %vm178, %v171, %v175
    %v180 = vand.u32 2147483647, %v170
    %vm181 = vcmp.eq.f32.partialorder %v180, 8.507059e+37
    %v182 = vand.u32 %v170, 2147483648
    %v183 = vor.u32 1.1754944e-38, %v182
    %v184 = vsel %vm181, %v183, %v179
    %v185 = vmul.f32 1.0, %v184
    %186 = vst [vmem:[#allocation10] sm:$0xff] %v185
    // Predicated region
    $region42: #{tpu_custom_call.1} parent=1 // pred_check
      _
    $region43: #{tpu_custom_call.1} parent=1 // pred_check_branch
      %188 = sbr.rel (0) target = $region45
    $region44: #{tpu_custom_call.1} parent=1 // pred_region
      %190 = vsyncadd [#allocation4], 0
      %s192 = sshll.u32 [#allocation10], 4
      %s193 = int_to_ptr.vmem [resolvable:$true] %s192
      %s194 = sshll.u32 %s6, 4
      %s195 = int_to_ptr.hbm [resolvable:$true] %s194
      %197 = dma.vmem_to_hbm [thread:$0]  %s193, 128, %s195, [#allocation4]
    $region45: #{tpu_custom_call.1} parent=1 // pred_fallthru
      _
    // Predicated region
    $region46: #{tpu_custom_call.1} parent=1 // pred_check
      _
    $region47: #{tpu_custom_call.1} parent=1 // pred_check_branch
      %199 = sbr.rel (0) target = $region49
    $region48: #{tpu_custom_call.1} parent=1 // pred_region
      %201 = dma.done [#allocation4], 128
    $region49: #{tpu_custom_call.1} parent=1 // pred_fallthru
      _
    %202 = vsyncpa [#allocation3], 1
    %203 = vsyncpa [#allocation6], 1
    %204 = vsyncpa [#allocation9], 1
    %205 = vsyncpa [#allocation4], 1

</llo_original>
